<compile_context>
chip_gen: v7x
topology: tpu7x:2x2x1
jax: 0.10.0
libtpu: 0.0.40
codegen_flags: <defaults>
</compile_context>

<pallas_src>
import functools

import jax
import jax.numpy as jnp
from jax.experimental import pallas as pl
from jax.experimental.pallas import tpu as pltpu

_EPS = 1e-5


# ---------------------------------------------------------------------------
# Phase 1: per-(n, c) sum / sum-of-squares over T, accumulated across T-tiles.
# ---------------------------------------------------------------------------
def _stats_kernel(x_ref, sum_ref, sq_ref):
    @pl.when(pl.program_id(0) == 0)
    def _():
        sum_ref[...] = jnp.zeros_like(sum_ref)
        sq_ref[...] = jnp.zeros_like(sq_ref)

    x = x_ref[...].astype(jnp.float32)            # (N, C, tT)
    sum_ref[...] += jnp.sum(x, axis=2)            # (N, C) lane-dense stats
    sq_ref[...] += jnp.sum(x * x, axis=2)         # x*x computed exactly once


# ---------------------------------------------------------------------------
# Phase 2: single folded affine apply.
#   out = x*A + D + G2*((x - lm)*r_ln) + B2
# ---------------------------------------------------------------------------
def _apply_kernel(x_ref, a_ref, d_ref, lm_ref, rln_ref, g2_ref, b2_ref, o_ref):
    x = x_ref[...].astype(jnp.float32)            # (1, C, tT)
    x_ln = (x - lm_ref[...]) * rln_ref[...]       # LayerNorm-normalized x
    out = x * a_ref[...] + d_ref[...] + g2_ref[...] * x_ln + b2_ref[...]
    o_ref[...] = out.astype(o_ref.dtype)


def _pick_t_tile(T, row_bytes):
    """Largest lane-dense (multiple-of-128) T tile that divides T, block <= ~2 MiB."""
    if T % 128 != 0:
        # Small / odd T: fall back to a single full-T block (BlockSpec rule:
        # last dim must be a multiple of 128 or the full extent).
        return T
    tile = 128
    for cand in (256, 512, 1024, 2048):
        if T % cand == 0 and row_bytes * cand <= (2 << 20):
            tile = cand
    return tile


@jax.jit
def switch_norm1d(x, bn_weight, bn_bias, ln_weight, ln_bias, switch_weight):
    N, C, T = x.shape
    tT = _pick_t_tile(T, N * C * 4)
    n_t = T // tT

    # ---- phase 1: per-(n, c) statistics, tiled + accumulated over T ----
    x_sum, x_sq = pl.pallas_call(
        _stats_kernel,
        out_shape=(jax.ShapeDtypeStruct((N, C), jnp.float32),
                   jax.ShapeDtypeStruct((N, C), jnp.float32)),
        grid=(n_t,),
        in_specs=[pl.BlockSpec((N, C, tT), lambda tj: (0, 0, tj))],
        out_specs=(pl.BlockSpec((N, C), lambda tj: (0, 0)),
                   pl.BlockSpec((N, C), lambda tj: (0, 0))),
        compiler_params=pltpu.CompilerParams(
            dimension_semantics=("arbitrary",)),
    )(x)

    # ---- tiny parameter/stat glue (plain JAX; O(N*C) elements) ----
    w = jax.nn.softmax(switch_weight.astype(jnp.float32))
    w0, w1, w2 = w[0], w[1], w[2]

    inv_T = 1.0 / T
    in_mean = x_sum * inv_T                                   # (N, C)
    in_sq = x_sq * inv_T
    r_in = jax.lax.rsqrt(in_sq - in_mean * in_mean + _EPS)    # InstanceNorm rsqrt

    bn_mean = jnp.mean(in_mean, axis=0)                       # (C,)
    bn_sq = jnp.mean(in_sq, axis=0)
    r_bn = jax.lax.rsqrt(bn_sq - bn_mean * bn_mean + _EPS)    # BatchNorm rsqrt

    ln_mean = jnp.mean(in_mean, axis=1)                       # (N,)
    ln_sq = jnp.mean(in_sq, axis=1)
    r_ln = jax.lax.rsqrt(ln_sq - ln_mean * ln_mean + _EPS)    # LayerNorm rsqrt

    gamma = bn_weight.astype(jnp.float32)
    beta = bn_bias.astype(jnp.float32)

    # Fold softmax weights + BN affine + IN into per-(n, c) scale/shift.
    a_nc = (w0 * gamma * r_bn)[None, :] + w1 * r_in
    d_nc = (w0 * (beta - gamma * r_bn * bn_mean))[None, :] - w1 * r_in * in_mean

    a_nc = a_nc.reshape(N, C, 1)
    d_nc = d_nc.reshape(N, C, 1)
    lm = ln_mean.reshape(N, 1, 1)
    rln = r_ln.reshape(N, 1, 1)
    g2 = (w2 * ln_weight.astype(jnp.float32)).reshape(1, C, T)   # w2 pre-folded
    b2 = (w2 * ln_bias.astype(jnp.float32)).reshape(1, C, T)

    # ---- phase 2: folded affine apply, tiled over (N, T) ----
    return pl.pallas_call(
        _apply_kernel,
        out_shape=jax.ShapeDtypeStruct((N, C, T), x.dtype),
        grid=(N, n_t),
        in_specs=[
            pl.BlockSpec((1, C, tT), lambda n, tj: (n, 0, tj)),   # x tile
            pl.BlockSpec((1, C, 1), lambda n, tj: (n, 0, 0)),     # A(n, c)
            pl.BlockSpec((1, C, 1), lambda n, tj: (n, 0, 0)),     # D(n, c)
            pl.BlockSpec((1, 1, 1), lambda n, tj: (n, 0, 0)),     # LN mean(n)
            pl.BlockSpec((1, 1, 1), lambda n, tj: (n, 0, 0)),     # LN rsqrt(n)
            pl.BlockSpec((1, C, tT), lambda n, tj: (0, 0, tj)),   # w2 * ln gamma
            pl.BlockSpec((1, C, tT), lambda n, tj: (0, 0, tj)),   # w2 * ln beta
        ],
        out_specs=pl.BlockSpec((1, C, tT), lambda n, tj: (n, 0, tj)),
        compiler_params=pltpu.CompilerParams(
            dimension_semantics=("parallel", "parallel")),
    )(x, a_nc, d_nc, lm, rln, g2, b2)


def switch_norm1d_ref(x, bn_w, bn_b, ln_w, ln_b, sw, eps=1e-5):
    """Pure-JAX reference mirroring the PyTorch forward (training mode)."""
    w = jax.nn.softmax(sw)
    bm = x.mean(axis=(0, 2), keepdims=True)
    bv = ((x - bm) ** 2).mean(axis=(0, 2), keepdims=True)
    y_bn = (x - bm) / jnp.sqrt(bv + eps) * bn_w[None, :, None] + bn_b[None, :, None]
    im = x.mean(axis=2, keepdims=True)
    iv = ((x - im) ** 2).mean(axis=2, keepdims=True)
    y_in = (x - im) / jnp.sqrt(iv + eps)
    lm = x.mean(axis=(1, 2), keepdims=True)
    lv = ((x - lm) ** 2).mean(axis=(1, 2), keepdims=True)
    y_ln = (x - lm) / jnp.sqrt(lv + eps) * ln_w[None] + ln_b[None]
    return w[0] * y_bn + w[1] * y_in + w[2] * y_ln


def _run_case(key, N, C, T):
    kx, kg, kb, kw = jax.random.split(key, 4)
    x = jax.random.normal(kx, (N, C, T), dtype=jnp.float32)
    bn_weight = 1.0 + 0.1 * jax.random.normal(kg, (C,), dtype=jnp.float32)
    bn_bias = 0.1 * jax.random.normal(kb, (C,), dtype=jnp.float32)
    ln_weight = jnp.ones((C, T), jnp.float32)
    ln_bias = jnp.zeros((C, T), jnp.float32)
    switch_weight = jnp.ones((3,), jnp.float32) + 0.05 * jax.random.normal(
        kw, (3,), dtype=jnp.float32)

    out = switch_norm1d(x, bn_weight, bn_bias, ln_weight, ln_bias, switch_weight)
    out = jax.block_until_ready(out)
    ref = switch_norm1d_ref(x, bn_weight, bn_bias, ln_weight, ln_bias, switch_weight)
    assert out.shape == (N, C, T)
    assert jnp.allclose(out, ref, atol=1e-4, rtol=1e-4), f"mismatch at {(N, C, T)}"


if __name__ == "__main__":
    key = jax.random.PRNGKey(0)
    k1, k2 = jax.random.split(key)

    # Module-sized case (batch=2, num_features=4, num_time_steps=8).
    _run_case(k1, 2, 4, 8)
    # Lane-dense case that exercises the tiled (grid > 1) accumulation path.
    _run_case(k2, 2, 8, 1280)

    print("KERNEL_OK")
</pallas_src>

<mosaic_0001>
module attributes {stable_mosaic.version = 11 : i64} {
  func.func @_stats_kernel(%arg0: i32, %arg1: memref<2x4x8xf32, #tpu.memory_space<vmem>>, %arg2: memref<2x4xf32, #tpu.memory_space<vmem>>, %arg3: memref<2x4xf32, #tpu.memory_space<vmem>>) attributes {dimension_semantics = [#tpu.dimension_semantics<arbitrary>], iteration_bounds = array<i64: 1>, scalar_prefetch = 0 : i64, scratch_operands = 0 : i64, tpu.core_type = #tpu.core_type<tc>, window_params = [{transform_indices = @transform_0, window_bounds = array<i64: 2, 4, 8>}, {pipeline_mode = #tpu.pipeline_mode<synchronous>, transform_indices = @transform_1, window_bounds = array<i64: 2, 4>}, {pipeline_mode = #tpu.pipeline_mode<synchronous>, transform_indices = @transform_2, window_bounds = array<i64: 2, 4>}]} {
    %c0_i32 = arith.constant 0 : i32
    %0 = arith.cmpi eq, %arg0, %c0_i32 : i32
    %1 = arith.extui %0 : i1 to i32
    %c0_i32_0 = arith.constant 0 : i32
    %2 = arith.cmpi ne, %1, %c0_i32_0 : i32
    scf.if %2 {
      %cst_12 = arith.constant 0.000000e+00 : f32
      %13 = vector.broadcast %cst_12 : f32 to vector<2x4xf32>
      %c0_13 = arith.constant 0 : index
      %c0_14 = arith.constant 0 : index
      %14 = vector.load %arg2[%c0_13, %c0_14] : memref<2x4xf32, #tpu.memory_space<vmem>>, vector<2x4xf32>
      tpu.vector_store %arg2[%c0_13, %c0_14], %13 {strides = array<i32>} : memref<2x4xf32, #tpu.memory_space<vmem>>, vector<2x4xf32>,
      %cst_15 = arith.constant 0.000000e+00 : f32
      %15 = vector.broadcast %cst_15 : f32 to vector<2x4xf32>
      %c0_16 = arith.constant 0 : index
      %c0_17 = arith.constant 0 : index
      %16 = vector.load %arg3[%c0_16, %c0_17] : memref<2x4xf32, #tpu.memory_space<vmem>>, vector<2x4xf32>
      tpu.vector_store %arg3[%c0_16, %c0_17], %15 {strides = array<i32>} : memref<2x4xf32, #tpu.memory_space<vmem>>, vector<2x4xf32>,
    } else {
    }
    %c0 = arith.constant 0 : index
    %c0_1 = arith.constant 0 : index
    %c0_2 = arith.constant 0 : index
    %3 = vector.load %arg1[%c0, %c0_1, %c0_2] : memref<2x4x8xf32, #tpu.memory_space<vmem>>, vector<2x4x8xf32>
    %c0_3 = arith.constant 0 : index
    %c0_4 = arith.constant 0 : index
    %4 = vector.load %arg2[%c0_3, %c0_4] : memref<2x4xf32, #tpu.memory_space<vmem>>, vector<2x4xf32>
    %cst = arith.constant dense<0.000000e+00> : vector<2x4xf32>
    %5 = vector.multi_reduction <add>, %3, %cst [2] : vector<2x4x8xf32> to vector<2x4xf32>
    %6 = arith.addf %4, %5 : vector<2x4xf32>
    %c0_5 = arith.constant 0 : index
    %c0_6 = arith.constant 0 : index
    %7 = vector.load %arg2[%c0_5, %c0_6] : memref<2x4xf32, #tpu.memory_space<vmem>>, vector<2x4xf32>
    tpu.vector_store %arg2[%c0_5, %c0_6], %6 {strides = array<i32>} : memref<2x4xf32, #tpu.memory_space<vmem>>, vector<2x4xf32>,
    %c0_7 = arith.constant 0 : index
    %c0_8 = arith.constant 0 : index
    %8 = vector.load %arg3[%c0_7, %c0_8] : memref<2x4xf32, #tpu.memory_space<vmem>>, vector<2x4xf32>
    %9 = arith.mulf %3, %3 : vector<2x4x8xf32>
    %cst_9 = arith.constant dense<0.000000e+00> : vector<2x4xf32>
    %10 = vector.multi_reduction <add>, %9, %cst_9 [2] : vector<2x4x8xf32> to vector<2x4xf32>
    %11 = arith.addf %8, %10 : vector<2x4xf32>
    %c0_10 = arith.constant 0 : index
    %c0_11 = arith.constant 0 : index
    %12 = vector.load %arg3[%c0_10, %c0_11] : memref<2x4xf32, #tpu.memory_space<vmem>>, vector<2x4xf32>
    tpu.vector_store %arg3[%c0_10, %c0_11], %11 {strides = array<i32>} : memref<2x4xf32, #tpu.memory_space<vmem>>, vector<2x4xf32>,
    return
  }
  func.func @transform_0(%arg0: i32) -> (i32, i32, i32) {
    %c0_i32 = arith.constant 0 : i32
    %c0_i32_0 = arith.constant 0 : i32
    %c0_i32_1 = arith.constant 0 : i32
    return %c0_i32, %c0_i32_0, %arg0 : i32, i32, i32
  }
  func.func @transform_1(%arg0: i32) -> (i32, i32) {
    %c0_i32 = arith.constant 0 : i32
    %c0_i32_0 = arith.constant 0 : i32
    %c0_i32_1 = arith.constant 0 : i32
    return %c0_i32, %c0_i32_0 : i32, i32
  }
  func.func @transform_2(%arg0: i32) -> (i32, i32) {
    %c0_i32 = arith.constant 0 : i32
    %c0_i32_0 = arith.constant 0 : i32
    %c0_i32_1 = arith.constant 0 : i32
    return %c0_i32, %c0_i32_0 : i32, i32
  }
}

module attributes {stable_mosaic.version = 11 : i64} {
  func.func @_apply_kernel(%arg0: i32, %arg1: i32, %arg2: memref<1x4x8xf32, #tpu.memory_space<vmem>>, %arg3: memref<1x4x1xf32, #tpu.memory_space<vmem>>, %arg4: memref<1x4x1xf32, #tpu.memory_space<vmem>>, %arg5: memref<1x1x1xf32, #tpu.memory_space<vmem>>, %arg6: memref<1x1x1xf32, #tpu.memory_space<vmem>>, %arg7: memref<1x4x8xf32, #tpu.memory_space<vmem>>, %arg8: memref<1x4x8xf32, #tpu.memory_space<vmem>>, %arg9: memref<1x4x8xf32, #tpu.memory_space<vmem>>) attributes {dimension_semantics = [#tpu.dimension_semantics<parallel>, #tpu.dimension_semantics<parallel>], iteration_bounds = array<i64: 2, 1>, scalar_prefetch = 0 : i64, scratch_operands = 0 : i64, tpu.core_type = #tpu.core_type<tc>, window_params = [{transform_indices = @transform_0, window_bounds = array<i64: 1, 4, 8>}, {transform_indices = @transform_1, window_bounds = array<i64: 1, 4, 1>}, {transform_indices = @transform_2, window_bounds = array<i64: 1, 4, 1>}, {transform_indices = @transform_3, window_bounds = array<i64: 1, 1, 1>}, {transform_indices = @transform_4, window_bounds = array<i64: 1, 1, 1>}, {transform_indices = @transform_5, window_bounds = array<i64: 1, 4, 8>}, {transform_indices = @transform_6, window_bounds = array<i64: 1, 4, 8>}, {transform_indices = @transform_7, window_bounds = array<i64: 1, 4, 8>}]} {
    %c0 = arith.constant 0 : index
    %c0_0 = arith.constant 0 : index
    %c0_1 = arith.constant 0 : index
    %0 = vector.load %arg2[%c0, %c0_0, %c0_1] : memref<1x4x8xf32, #tpu.memory_space<vmem>>, vector<1x4x8xf32>
    %c0_2 = arith.constant 0 : index
    %c0_3 = arith.constant 0 : index
    %c0_4 = arith.constant 0 : index
    %1 = vector.load %arg5[%c0_2, %c0_3, %c0_4] : memref<1x1x1xf32, #tpu.memory_space<vmem>>, vector<1x1x1xf32>
    %2 = vector.broadcast %1 : vector<1x1x1xf32> to vector<1x4x8xf32>
    %3 = arith.subf %0, %2 : vector<1x4x8xf32>
    %c0_5 = arith.constant 0 : index
    %c0_6 = arith.constant 0 : index
    %c0_7 = arith.constant 0 : index
    %4 = vector.load %arg6[%c0_5, %c0_6, %c0_7] : memref<1x1x1xf32, #tpu.memory_space<vmem>>, vector<1x1x1xf32>
    %5 = vector.broadcast %4 : vector<1x1x1xf32> to vector<1x4x8xf32>
    %6 = arith.mulf %3, %5 : vector<1x4x8xf32>
    %c0_8 = arith.constant 0 : index
    %c0_9 = arith.constant 0 : index
    %c0_10 = arith.constant 0 : index
    %7 = vector.load %arg3[%c0_8, %c0_9, %c0_10] : memref<1x4x1xf32, #tpu.memory_space<vmem>>, vector<1x4x1xf32>
    %8 = vector.broadcast %7 : vector<1x4x1xf32> to vector<1x4x8xf32>
    %9 = arith.mulf %0, %8 : vector<1x4x8xf32>
    %c0_11 = arith.constant 0 : index
    %c0_12 = arith.constant 0 : index
    %c0_13 = arith.constant 0 : index
    %10 = vector.load %arg4[%c0_11, %c0_12, %c0_13] : memref<1x4x1xf32, #tpu.memory_space<vmem>>, vector<1x4x1xf32>
    %11 = vector.broadcast %10 : vector<1x4x1xf32> to vector<1x4x8xf32>
    %12 = arith.addf %9, %11 : vector<1x4x8xf32>
    %c0_14 = arith.constant 0 : index
    %c0_15 = arith.constant 0 : index
    %c0_16 = arith.constant 0 : index
    %13 = vector.load %arg7[%c0_14, %c0_15, %c0_16] : memref<1x4x8xf32, #tpu.memory_space<vmem>>, vector<1x4x8xf32>
    %14 = arith.mulf %13, %6 : vector<1x4x8xf32>
    %15 = arith.addf %12, %14 : vector<1x4x8xf32>
    %c0_17 = arith.constant 0 : index
    %c0_18 = arith.constant 0 : index
    %c0_19 = arith.constant 0 : index
    %16 = vector.load %arg8[%c0_17, %c0_18, %c0_19] : memref<1x4x8xf32, #tpu.memory_space<vmem>>, vector<1x4x8xf32>
    %17 = arith.addf %15, %16 : vector<1x4x8xf32>
    %c0_20 = arith.constant 0 : index
    %c0_21 = arith.constant 0 : index
    %c0_22 = arith.constant 0 : index
    %18 = vector.load %arg9[%c0_20, %c0_21, %c0_22] : memref<1x4x8xf32, #tpu.memory_space<vmem>>, vector<1x4x8xf32>
    tpu.vector_store %arg9[%c0_20, %c0_21, %c0_22], %17 {strides = array<i32>} : memref<1x4x8xf32, #tpu.memory_space<vmem>>, vector<1x4x8xf32>,
    return
  }
  func.func @transform_0(%arg0: i32, %arg1: i32) -> (i32, i32, i32) {
    %c0_i32 = arith.constant 0 : i32
    %c0_i32_0 = arith.constant 0 : i32
    return %arg0, %c0_i32, %arg1 : i32, i32, i32
  }
  func.func @transform_1(%arg0: i32, %arg1: i32) -> (i32, i32, i32) {
    %c0_i32 = arith.constant 0 : i32
    %c0_i32_0 = arith.constant 0 : i32
    %c0_i32_1 = arith.constant 0 : i32
    return %arg0, %c0_i32, %c0_i32_0 : i32, i32, i32
  }
  func.func @transform_2(%arg0: i32, %arg1: i32) -> (i32, i32, i32) {
    %c0_i32 = arith.constant 0 : i32
    %c0_i32_0 = arith.constant 0 : i32
    %c0_i32_1 = arith.constant 0 : i32
    return %arg0, %c0_i32, %c0_i32_0 : i32, i32, i32
  }
  func.func @transform_3(%arg0: i32, %arg1: i32) -> (i32, i32, i32) {
    %c0_i32 = arith.constant 0 : i32
    %c0_i32_0 = arith.constant 0 : i32
    %c0_i32_1 = arith.constant 0 : i32
    return %arg0, %c0_i32, %c0_i32_0 : i32, i32, i32
  }
  func.func @transform_4(%arg0: i32, %arg1: i32) -> (i32, i32, i32) {
    %c0_i32 = arith.constant 0 : i32
    %c0_i32_0 = arith.constant 0 : i32
    %c0_i32_1 = arith.constant 0 : i32
    return %arg0, %c0_i32, %c0_i32_0 : i32, i32, i32
  }
  func.func @transform_5(%arg0: i32, %arg1: i32) -> (i32, i32, i32) {
    %c0_i32 = arith.constant 0 : i32
    %c0_i32_0 = arith.constant 0 : i32
    %c0_i32_1 = arith.constant 0 : i32
    return %c0_i32, %c0_i32_0, %arg1 : i32, i32, i32
  }
  func.func @transform_6(%arg0: i32, %arg1: i32) -> (i32, i32, i32) {
    %c0_i32 = arith.constant 0 : i32
    %c0_i32_0 = arith.constant 0 : i32
    %c0_i32_1 = arith.constant 0 : i32
    return %c0_i32, %c0_i32_0, %arg1 : i32, i32, i32
  }
  func.func @transform_7(%arg0: i32, %arg1: i32) -> (i32, i32, i32) {
    %c0_i32 = arith.constant 0 : i32
    %c0_i32_0 = arith.constant 0 : i32
    return %arg0, %c0_i32, %arg1 : i32, i32, i32
  }
}

</mosaic_0001>

<llo_original>
// kernel: switch_norm1d.3
$region0: #{switch_norm1d.3}
  #allocation0 [shape = 'u32[]', space=smem, size = 0x4, offset = 0x4, fixed_abs, tag = 'smem constant byte address 0x4 - core index']
  #allocation1 [shape = 'u32[144,128]{1,0:T(1,128)}', space=vmem, size = 0x12000, scoped, tag = 'internal scratch']
  %s0 = inlined_call_operand.vmem [shape: f32[2,4,8], index: 0, kind: input, shape index: {}]
  %s1 = inlined_call_operand.vmem [shape: f32[2,4,1], index: 1, kind: input, shape index: {}]
  %s2 = inlined_call_operand.vmem [shape: f32[2,4,1], index: 2, kind: input, shape index: {}]
  %s3 = inlined_call_operand.vmem [shape: f32[2,1,1], index: 3, kind: input, shape index: {}]
  %s4 = inlined_call_operand.vmem [shape: f32[2,1,1], index: 4, kind: input, shape index: {}]
  %s5 = inlined_call_operand.vmem [shape: f32[1,4,8], index: 5, kind: input, shape index: {}]
  %s6 = inlined_call_operand.vmem [shape: f32[1,4,8], index: 6, kind: input, shape index: {}]
  %s7 = inlined_call_operand.hbm [shape: f32[2,4,8], index: 7, kind: output, shape index: {}]
  %s8 = sld [smem:[#allocation0]]
  $region61: #{switch_norm1d.3} parent=0
    _
  %s10 = ssub.s32 1, %s8
  %s11 = scalar_select 0, %s10, %s8
  $region1: #{switch_norm1d.3} parent=0
    #allocation2 [shape = 'u8[4096]{0}', space=vmem, size = 0x1000, scoped, tag = 'output window, operand 0']
    #allocation3 [shape = 's32[2]{0}', space=sflag, size = 0x8, scoped, tag = 'scoped memory for switch_norm1d.3']
    %12 = vsyncpa [#allocation3], 0
    %s13 = scalar_lea.sflag [#allocation3], 1
    %14 = vsyncpa %s13, 0
    loop: start=0, step=1, limit=4
    $region2: #{switch_norm1d.3} parent=1 // loop_pre_header
      _
    $region3: #{switch_norm1d.3} parent=1 // loop_header
      %s16 = sphi 0, %s20
      %p17 = scmp.ge.s32.totalorder %s16, 4
      %s23 = sphi 0, %s35
      %s24 = sphi 0, %s31
      %s25 = sphi 0, %s23
      %s26 = sphi 0, %s24
      %s27 = sphi 0, %s25
      %s28 = sphi 0, %s26
      %s40 = sphi 0, %s42
      %s43 = sphi 0, %s40
      %s44 = sphi 0, %s43
      %s60 = sphi 0, %s44
      %s66 = sphi 0, %s68
      %s69 = sphi 0, %s66
      %s70 = sphi 0, %s69
      %s86 = sphi 0, %s70
      %s92 = sphi 0, %s94
      %s95 = sphi 0, %s92
      %s96 = sphi 0, %s95
      %s112 = sphi 0, %s96
      %s118 = sphi 0, %s120
      %s121 = sphi 0, %s118
      %s122 = sphi 0, %s121
      %s138 = sphi 0, %s122
      %s144 = sphi 0, %s146
      %s147 = sphi 0, %s144
      %s148 = sphi 0, %s147
      %s164 = sphi 0, %s148
      %s170 = sphi 0, %s172
      %s173 = sphi 0, %s170
      %s174 = sphi 0, %s173
      %s190 = sphi 0, %s174
      %s196 = sphi 0, %s198
      %s199 = sphi 0, %s196
      %s200 = sphi 0, %s199
      %s216 = sphi 0, %s200
      %s224 = sphi 0, %s226
      %s227 = sphi 0, %s224
      %s228 = sphi 0, %s227
      %s244 = sphi 0, %s228
    $region4: #{switch_norm1d.3} parent=1 // loop_header_branch
      %19 = sbr.rel (%p17) target = $region8
    $region5: #{switch_norm1d.3} parent=1 // loop_body
      %s21 = ssub.s32 %s16, 1
      %s22 = ssub.s32 %s16, 2
      %s29 = sadd.s32 1, %s24
      %p30 = scmp.ge.s32.totalorder %s29, 1
      %s31 = scalar_select %p30, 0, %s29
      %s32 = sadd.s32 1, %s23
      %s33 = scalar_select %p30, %s32, %s23
      %p34 = scmp.ge.s32.totalorder %s33, 2
      %s35 = scalar_select %p34, 0, %s33
      %s36 = ssub.s32 %s23, %s35
      %s37 = ssub.s32 %s24, %s31
      %s38 = sor.u32 %s36, %s37
      %p39 = scmp.eq.s32.totalorder %s38, 0
      %s41 = sadd.s32 %s40, 1
      %s42 = scalar_select %p39, %s40, %s41
      %p45 = pneg %p39
      %p46 = scmp.eq.s32.totalorder %s16, 1
      %p47 = por %p45, %p46
      %p48 = scmp.ne.s32.totalorder %s40, %s43
      %p49 = scmp.eq.s32.totalorder %s16, 0
      %p50 = por %p48, %p49
      %p51 = scmp.ne.s32.totalorder %s40, %s43
      %p52 = scmp.eq.s32.totalorder %s21, 1
      %p53 = por %p51, %p52
      %p54 = scmp.ne.s32.totalorder %s43, %s44
      %p55 = scmp.eq.s32.totalorder %s21, 0
      %p56 = por %p54, %p55
      %p57 = scmp.ne.s32.totalorder %s43, %s44
      %p58 = scmp.eq.s32.totalorder %s22, 1
      %p59 = por %p57, %p58
      %p61 = scmp.ne.s32.totalorder %s44, %s60
      %p62 = scmp.eq.s32.totalorder %s22, 0
      %p63 = por %p61, %p62
      %s64 = ssub.s32 %s23, %s35
      %p65 = scmp.eq.s32.totalorder %s64, 0
      %s67 = sadd.s32 %s66, 1
      %s68 = scalar_select %p65, %s66, %s67
      %p71 = pneg %p65
      %p72 = scmp.eq.s32.totalorder %s16, 1
      %p73 = por %p71, %p72
      %p74 = scmp.ne.s32.totalorder %s66, %s69
      %p75 = scmp.eq.s32.totalorder %s16, 0
      %p76 = por %p74, %p75
      %p77 = scmp.ne.s32.totalorder %s66, %s69
      %p78 = scmp.eq.s32.totalorder %s21, 1
      %p79 = por %p77, %p78
      %p80 = scmp.ne.s32.totalorder %s69, %s70
      %p81 = scmp.eq.s32.totalorder %s21, 0
      %p82 = por %p80, %p81
      %p83 = scmp.ne.s32.totalorder %s69, %s70
      %p84 = scmp.eq.s32.totalorder %s22, 1
      %p85 = por %p83, %p84
      %p87 = scmp.ne.s32.totalorder %s70, %s86
      %p88 = scmp.eq.s32.totalorder %s22, 0
      %p89 = por %p87, %p88
      %s90 = ssub.s32 %s23, %s35
      %p91 = scmp.eq.s32.totalorder %s90, 0
      %s93 = sadd.s32 %s92, 1
      %s94 = scalar_select %p91, %s92, %s93
      %p97 = pneg %p91
      %p98 = scmp.eq.s32.totalorder %s16, 1
      %p99 = por %p97, %p98
      %p100 = scmp.ne.s32.totalorder %s92, %s95
      %p101 = scmp.eq.s32.totalorder %s16, 0
      %p102 = por %p100, %p101
      %p103 = scmp.ne.s32.totalorder %s92, %s95
      %p104 = scmp.eq.s32.totalorder %s21, 1
      %p105 = por %p103, %p104
      %p106 = scmp.ne.s32.totalorder %s95, %s96
      %p107 = scmp.eq.s32.totalorder %s21, 0
      %p108 = por %p106, %p107
      %p109 = scmp.ne.s32.totalorder %s95, %s96
      %p110 = scmp.eq.s32.totalorder %s22, 1
      %p111 = por %p109, %p110
      %p113 = scmp.ne.s32.totalorder %s96, %s112
      %p114 = scmp.eq.s32.totalorder %s22, 0
      %p115 = por %p113, %p114
      %s116 = ssub.s32 %s23, %s35
      %p117 = scmp.eq.s32.totalorder %s116, 0
      %s119 = sadd.s32 %s118, 1
      %s120 = scalar_select %p117, %s118, %s119
      %p123 = pneg %p117
      %p124 = scmp.eq.s32.totalorder %s16, 1
      %p125 = por %p123, %p124
      %p126 = scmp.ne.s32.totalorder %s118, %s121
      %p127 = scmp.eq.s32.totalorder %s16, 0
      %p128 = por %p126, %p127
      %p129 = scmp.ne.s32.totalorder %s118, %s121
      %p130 = scmp.eq.s32.totalorder %s21, 1
      %p131 = por %p129, %p130
      %p132 = scmp.ne.s32.totalorder %s121, %s122
      %p133 = scmp.eq.s32.totalorder %s21, 0
      %p134 = por %p132, %p133
      %p135 = scmp.ne.s32.totalorder %s121, %s122
      %p136 = scmp.eq.s32.totalorder %s22, 1
      %p137 = por %p135, %p136
      %p139 = scmp.ne.s32.totalorder %s122, %s138
      %p140 = scmp.eq.s32.totalorder %s22, 0
      %p141 = por %p139, %p140
      %s142 = ssub.s32 %s23, %s35
      %p143 = scmp.eq.s32.totalorder %s142, 0
      %s145 = sadd.s32 %s144, 1
      %s146 = scalar_select %p143, %s144, %s145
      %p149 = pneg %p143
      %p150 = scmp.eq.s32.totalorder %s16, 1
      %p151 = por %p149, %p150
      %p152 = scmp.ne.s32.totalorder %s144, %s147
      %p153 = scmp.eq.s32.totalorder %s16, 0
      %p154 = por %p152, %p153
      %p155 = scmp.ne.s32.totalorder %s144, %s147
      %p156 = scmp.eq.s32.totalorder %s21, 1
      %p157 = por %p155, %p156
      %p158 = scmp.ne.s32.totalorder %s147, %s148
      %p159 = scmp.eq.s32.totalorder %s21, 0
      %p160 = por %p158, %p159
      %p161 = scmp.ne.s32.totalorder %s147, %s148
      %p162 = scmp.eq.s32.totalorder %s22, 1
      %p163 = por %p161, %p162
      %p165 = scmp.ne.s32.totalorder %s148, %s164
      %p166 = scmp.eq.s32.totalorder %s22, 0
      %p167 = por %p165, %p166
      %s168 = ssub.s32 %s24, %s31
      %p169 = scmp.eq.s32.totalorder %s168, 0
      %s171 = sadd.s32 %s170, 1
      %s172 = scalar_select %p169, %s170, %s171
      %p175 = pneg %p169
      %p176 = scmp.eq.s32.totalorder %s16, 1
      %p177 = por %p175, %p176
      %p178 = scmp.ne.s32.totalorder %s170, %s173
      %p179 = scmp.eq.s32.totalorder %s16, 0
      %p180 = por %p178, %p179
      %p181 = scmp.ne.s32.totalorder %s170, %s173
      %p182 = scmp.eq.s32.totalorder %s21, 1
      %p183 = por %p181, %p182
      %p184 = scmp.ne.s32.totalorder %s173, %s174
      %p185 = scmp.eq.s32.totalorder %s21, 0
      %p186 = por %p184, %p185
      %p187 = scmp.ne.s32.totalorder %s173, %s174
      %p188 = scmp.eq.s32.totalorder %s22, 1
      %p189 = por %p187, %p188
      %p191 = scmp.ne.s32.totalorder %s174, %s190
      %p192 = scmp.eq.s32.totalorder %s22, 0
      %p193 = por %p191, %p192
      %s194 = ssub.s32 %s24, %s31
      %p195 = scmp.eq.s32.totalorder %s194, 0
      %s197 = sadd.s32 %s196, 1
      %s198 = scalar_select %p195, %s196, %s197
      %p201 = pneg %p195
      %p202 = scmp.eq.s32.totalorder %s16, 1
      %p203 = por %p201, %p202
      %p204 = scmp.ne.s32.totalorder %s196, %s199
      %p205 = scmp.eq.s32.totalorder %s16, 0
      %p206 = por %p204, %p205
      %p207 = scmp.ne.s32.totalorder %s196, %s199
      %p208 = scmp.eq.s32.totalorder %s21, 1
      %p209 = por %p207, %p208
      %p210 = scmp.ne.s32.totalorder %s199, %s200
      %p211 = scmp.eq.s32.totalorder %s21, 0
      %p212 = por %p210, %p211
      %p213 = scmp.ne.s32.totalorder %s199, %s200
      %p214 = scmp.eq.s32.totalorder %s22, 1
      %p215 = por %p213, %p214
      %p217 = scmp.ne.s32.totalorder %s200, %s216
      %p218 = scmp.eq.s32.totalorder %s22, 0
      %p219 = por %p217, %p218
      %s220 = ssub.s32 %s23, %s35
      %s221 = ssub.s32 %s24, %s31
      %s222 = sor.u32 %s220, %s221
      %p223 = scmp.eq.s32.totalorder %s222, 0
      %s225 = sadd.s32 %s224, 1
      %s226 = scalar_select %p223, %s224, %s225
      %p229 = pneg %p223
      %p230 = scmp.eq.s32.totalorder %s16, 1
      %p231 = por %p229, %p230
      %p232 = scmp.ne.s32.totalorder %s224, %s227
      %p233 = scmp.eq.s32.totalorder %s16, 0
      %p234 = por %p232, %p233
      %p235 = scmp.ne.s32.totalorder %s224, %s227
      %p236 = scmp.eq.s32.totalorder %s21, 1
      %p237 = por %p235, %p236
      %p238 = scmp.ne.s32.totalorder %s227, %s228
      %p239 = scmp.eq.s32.totalorder %s21, 0
      %p240 = por %p238, %p239
      %p241 = scmp.ne.s32.totalorder %s227, %s228
      %p242 = scmp.eq.s32.totalorder %s22, 1
      %p243 = por %p241, %p242
      %p245 = scmp.ne.s32.totalorder %s228, %s244
      %p246 = scmp.eq.s32.totalorder %s22, 0
      %p247 = por %p245, %p246
      %p248 = scmp.le.s32.totalorder 1, %s16
      %p249 = scmp.lt.s32.totalorder %s16, 3
      %p250 = pnand %p248, %p249
      %p251 = pneg %p250
      // Predicated region
      $region9: #{switch_norm1d.3} parent=5 // pred_check
        _
      $region10: #{switch_norm1d.3} parent=5 // pred_check_branch
        %253 = sbr.rel (%p250) target = $region12
      $region11: #{switch_norm1d.3} parent=5 // pred_region
        %s254 = ssub.s32 %s16, 1
        // Predicated region
        $region13: #{switch_norm1d.3} parent=11 // pred_check
          %p255 = pneg %p186
        $region14: #{switch_norm1d.3} parent=11 // pred_check_branch
          %257 = sbr.rel (%p255) target = $region16
        $region15: #{switch_norm1d.3} parent=11 // pred_region
          %p258 = scmp.lt.s32.totalorder %s26, 0
          %s259 = scalar_select %p258, %s26, 0
          %s260 = smul.addr %s259, 4
          %s261 = scalar_lea.vmem %s5, %s260
        $region16: #{switch_norm1d.3} parent=11 // pred_fallthru
          _
        // Predicated region
        $region17: #{switch_norm1d.3} parent=11 // pred_check
          %p262 = pneg %p212
        $region18: #{switch_norm1d.3} parent=11 // pred_check_branch
          %264 = sbr.rel (%p262) target = $region20
        $region19: #{switch_norm1d.3} parent=11 // pred_region
          %p265 = scmp.lt.s32.totalorder %s26, 0
          %s266 = scalar_select %p265, %s26, 0
          %s267 = smul.addr %s266, 4
          %s268 = scalar_lea.vmem %s6, %s267
        $region20: #{switch_norm1d.3} parent=11 // pred_fallthru
          _
      $region12: #{switch_norm1d.3} parent=5 // pred_fallthru
        _
      %p269 = scmp.lt.s32.totalorder %s16, 2
      // Predicated region
      $region21: #{switch_norm1d.3} parent=5 // pred_check
        %p270 = pneg %p269
      $region22: #{switch_norm1d.3} parent=5 // pred_check_branch
        %272 = sbr.rel (%p270) target = $region24
      $region23: #{switch_norm1d.3} parent=5 // pred_region
        // Predicated region
        $region25: #{switch_norm1d.3} parent=23 // pred_check
          %p273 = pneg %p50
        $region26: #{switch_norm1d.3} parent=23 // pred_check_branch
          %275 = sbr.rel (%p273) target = $region28
        $region27: #{switch_norm1d.3} parent=23 // pred_region
          %p276 = scmp.lt.s32.totalorder %s23, 1
          %s277 = scalar_select %p276, %s23, 1
          %p278 = scmp.lt.s32.totalorder %s24, 0
          %s279 = scalar_select %p278, %s24, 0
          %s280 = sadd.s32 %s279, %s277
          %s281 = smul.addr %s280, 4
          %s282 = scalar_lea.vmem %s0, %s281
        $region28: #{switch_norm1d.3} parent=23 // pred_fallthru
          _
        // Predicated region
        $region29: #{switch_norm1d.3} parent=23 // pred_check
          %p283 = pneg %p76
        $region30: #{switch_norm1d.3} parent=23 // pred_check_branch
          %285 = sbr.rel (%p283) target = $region32
        $region31: #{switch_norm1d.3} parent=23 // pred_region
          %p286 = scmp.lt.s32.totalorder %s23, 1
          %s287 = scalar_select %p286, %s23, 1
          %s288 = smul.addr %s287, 4
          %s289 = scalar_lea.vmem %s1, %s288
        $region32: #{switch_norm1d.3} parent=23 // pred_fallthru
          _
        // Predicated region
        $region33: #{switch_norm1d.3} parent=23 // pred_check
          %p290 = pneg %p102
        $region34: #{switch_norm1d.3} parent=23 // pred_check_branch
          %292 = sbr.rel (%p290) target = $region36
        $region35: #{switch_norm1d.3} parent=23 // pred_region
          %p293 = scmp.lt.s32.totalorder %s23, 1
          %s294 = scalar_select %p293, %s23, 1
          %s295 = smul.addr %s294, 4
          %s296 = scalar_lea.vmem %s2, %s295
        $region36: #{switch_norm1d.3} parent=23 // pred_fallthru
          _
        // Predicated region
        $region37: #{switch_norm1d.3} parent=23 // pred_check
          %p297 = pneg %p128
        $region38: #{switch_norm1d.3} parent=23 // pred_check_branch
          %299 = sbr.rel (%p297) target = $region40
        $region39: #{switch_norm1d.3} parent=23 // pred_region
          %p300 = scmp.lt.s32.totalorder %s23, 1
          %s301 = scalar_select %p300, %s23, 1
          %s302 = scalar_lea.vmem %s3, %s301
        $region40: #{switch_norm1d.3} parent=23 // pred_fallthru
          _
        // Predicated region
        $region41: #{switch_norm1d.3} parent=23 // pred_check
          %p303 = pneg %p154
        $region42: #{switch_norm1d.3} parent=23 // pred_check_branch
          %305 = sbr.rel (%p303) target = $region44
        $region43: #{switch_norm1d.3} parent=23 // pred_region
          %p306 = scmp.lt.s32.totalorder %s23, 1
          %s307 = scalar_select %p306, %s23, 1
          %s308 = scalar_lea.vmem %s4, %s307
        $region44: #{switch_norm1d.3} parent=23 // pred_fallthru
          _
      $region24: #{switch_norm1d.3} parent=5 // pred_fallthru
        _
      %p309 = scmp.le.s32.totalorder 1, %s16
      %p310 = scmp.lt.s32.totalorder %s16, 3
      %p311 = pnand %p309, %p310
      %p312 = pneg %p311
      // Predicated region
      $region45: #{switch_norm1d.3} parent=5 // pred_check
        _
      $region46: #{switch_norm1d.3} parent=5 // pred_check_branch
        %314 = sbr.rel (%p311) target = $region48
      $region47: #{switch_norm1d.3} parent=5 // pred_region
        %s315 = ssub.s32 %s16, 1
        %p316 = scmp.lt.s32.totalorder %s25, 1
        %s317 = scalar_select %p316, %s25, 1
        %p318 = scmp.lt.s32.totalorder %s26, 0
        %s319 = scalar_select %p318, %s26, 0
        %s320 = sadd.s32 %s319, %s317
        %s321 = smul.addr %s320, 4
        %s322 = scalar_lea.vmem %s0, %s321
        %p323 = pneg %p56
        %p324 = pneg %p53
        %p325 = scmp.lt.s32.totalorder %s25, 1
        %s326 = scalar_select %p325, %s25, 1
        %s327 = smul.addr %s326, 4
        %s328 = scalar_lea.vmem %s1, %s327
        %p329 = pneg %p82
        %p330 = pneg %p79
        %p331 = scmp.lt.s32.totalorder %s25, 1
        %s332 = scalar_select %p331, %s25, 1
        %s333 = smul.addr %s332, 4
        %s334 = scalar_lea.vmem %s2, %s333
        %p335 = pneg %p108
        %p336 = pneg %p105
        %p337 = scmp.lt.s32.totalorder %s25, 1
        %s338 = scalar_select %p337, %s25, 1
        %s339 = scalar_lea.vmem %s3, %s338
        %p340 = pneg %p134
        %p341 = pneg %p131
        %p342 = scmp.lt.s32.totalorder %s25, 1
        %s343 = scalar_select %p342, %s25, 1
        %s344 = scalar_lea.vmem %s4, %s343
        %p345 = pneg %p160
        %p346 = pneg %p157
        %p347 = scmp.lt.s32.totalorder %s26, 0
        %s348 = scalar_select %p347, %s26, 0
        %s349 = smul.addr %s348, 4
        %s350 = scalar_lea.vmem %s5, %s349
        %p351 = pneg %p186
        %p352 = pneg %p183
        %p353 = scmp.lt.s32.totalorder %s26, 0
        %s354 = scalar_select %p353, %s26, 0
        %s355 = smul.addr %s354, 4
        %s356 = scalar_lea.vmem %s6, %s355
        %p357 = pneg %p212
        %p358 = pneg %p209
        %p359 = pneg %p240
        %p360 = pneg %p237
        %s361 = sand.u32 %s227, 1
        %s362 = scalar_lea.sflag [#allocation3], %s361
        %s363 = sand.u32 %s227, 1
        %s364 = smul.addr %s363, 4
        %s365 = scalar_lea.vmem [#allocation2], %s364
        %p366 = scmp.lt.s32.totalorder %s25, 1
        %s367 = scalar_select %p366, %s25, 1
        %p368 = scmp.lt.s32.totalorder %s26, 0
        %s369 = scalar_select %p368, %s26, 0
        %s370 = sadd.s32 %s369, %s367
        %s371 = smul.addr %s370, 4
        %s372 = scalar_lea.vmem %s0, %s371
        %p373 = scmp.lt.s32.totalorder %s25, 1
        %s374 = scalar_select %p373, %s25, 1
        %s375 = smul.addr %s374, 4
        %s376 = scalar_lea.vmem %s1, %s375
        %p377 = scmp.lt.s32.totalorder %s25, 1
        %s378 = scalar_select %p377, %s25, 1
        %s379 = smul.addr %s378, 4
        %s380 = scalar_lea.vmem %s2, %s379
        %p381 = scmp.lt.s32.totalorder %s25, 1
        %s382 = scalar_select %p381, %s25, 1
        %s383 = scalar_lea.vmem %s3, %s382
        %p384 = scmp.lt.s32.totalorder %s25, 1
        %s385 = scalar_select %p384, %s25, 1
        %s386 = scalar_lea.vmem %s4, %s385
        %p387 = scmp.lt.s32.totalorder %s26, 0
        %s388 = scalar_select %p387, %s26, 0
        %s389 = smul.addr %s388, 4
        %s390 = scalar_lea.vmem %s5, %s389
        %p391 = scmp.lt.s32.totalorder %s26, 0
        %s392 = scalar_select %p391, %s26, 0
        %s393 = smul.addr %s392, 4
        %s394 = scalar_lea.vmem %s6, %s393
        %v395 = vld [vmem:[%s372] sm:$0xf]
        %v396 = vld [vmem:[%s383] sm:$0x1]
        %v398 = vlaneseq
        %v399 = vshrl.u32 %v398, 7
        %v400 = vsub.s32 0, %v399
        %v401 = vrot.slane %v396, %v400
        %402 = vset.pattern.permute.xlu0 0
        %403 = vperm.xlu0 %402, %v401
        %v404 = vpop.permute.xlu0 %403
        %v406 = vsub.f32 %v395, %v404
        %v407 = vld [vmem:[%s386] sm:$0x1]
        %v409 = vlaneseq
        %v410 = vshrl.u32 %v409, 7
        %v411 = vsub.s32 0, %v410
        %v412 = vrot.slane %v407, %v411
        %413 = vset.pattern.permute.xlu0 0
        %414 = vperm.xlu0 %413, %v412
        %v415 = vpop.permute.xlu0 %414
        %v417 = vmul.f32 %v406, %v415
        %v418 = vld [vmem:[%s376] sm:$0xf]
        %420 = vset.pattern.permute.xlu0 0
        %421 = vperm.xlu0 %420, %v418
        %v422 = vpop.permute.xlu0 %421
        %v424 = vmul.f32 %v395, %v422
        %v425 = vld [vmem:[%s380] sm:$0xf]
        %427 = vset.pattern.permute.xlu0 0
        %428 = vperm.xlu0 %427, %v425
        %v429 = vpop.permute.xlu0 %428
        %v431 = vadd.f32 %v424, %v429
        %v432 = vld [vmem:[%s390] sm:$0xf]
        %v433 = vmul.f32 %v432, %v417
        %v434 = vadd.f32 %v431, %v433
        %v435 = vld [vmem:[%s394] sm:$0xf]
        %v436 = vadd.f32 %v434, %v435
        %vm437 = vcmask 60416
        %438 = vst.msk [vmem:[%s365] sm:$0xf] %vm437, %v436
        %s439 = sand.u32 %s227, 1
        %s440 = scalar_lea.sflag [#allocation3], %s439
        %s441 = sand.u32 %s227, 1
        %s442 = smul.addr %s441, 4
        %s443 = scalar_lea.vmem [#allocation2], %s442
        // Predicated region
        $region49: #{switch_norm1d.3} parent=47 // pred_check
          %p444 = pneg %p237
        $region50: #{switch_norm1d.3} parent=47 // pred_check_branch
          %446 = sbr.rel (%p444) target = $region52
        $region51: #{switch_norm1d.3} parent=47 // pred_region
          %s448 = ssub.s32 64, 64
          %449 = vsyncadd %s440, %s448
          %s450 = sadd.s32 %s26, %s25
          %s451 = smul.addr %s450, 64
          %s452 = scalar_lea.hbm %s7, %s451
          %s454 = sshll.u32 %s443, 4
          %s455 = int_to_ptr.vmem [resolvable:$true] %s454
          %457 = dma.vmem_to_hbm [thread:$0]  %s455, 64, %s452, %s440
        $region52: #{switch_norm1d.3} parent=47 // pred_fallthru
          _
      $region48: #{switch_norm1d.3} parent=5 // pred_fallthru
        _
      %p458 = scmp.le.s32.totalorder 2, %s16
      // Predicated region
      $region53: #{switch_norm1d.3} parent=5 // pred_check
        %p459 = pneg %p458
      $region54: #{switch_norm1d.3} parent=5 // pred_check_branch
        %461 = sbr.rel (%p459) target = $region56
      $region55: #{switch_norm1d.3} parent=5 // pred_region
        %s462 = ssub.s32 %s16, 2
        // Predicated region
        $region57: #{switch_norm1d.3} parent=55 // pred_check
          %p463 = pneg %p243
        $region58: #{switch_norm1d.3} parent=55 // pred_check_branch
          %465 = sbr.rel (%p463) target = $region60
        $region59: #{switch_norm1d.3} parent=55 // pred_region
          %s466 = sand.u32 %s228, 1
          %s467 = scalar_lea.sflag [#allocation3], %s466
          %s468 = sand.u32 %s228, 1
          %s469 = smul.addr %s468, 4
          %s470 = scalar_lea.vmem [#allocation2], %s469
          %471 = dma.done %s467, 64
        $region60: #{switch_norm1d.3} parent=55 // pred_fallthru
          _
      $region56: #{switch_norm1d.3} parent=5 // pred_fallthru
        _
    $region6: #{switch_norm1d.3} parent=1 // loop_footer
      %s20 = sadd.s32 1, %s16
    $region7: #{switch_norm1d.3} parent=1 // loop_footer_branch
      %15 = sbr.rel target = $region3
    $region8: #{switch_norm1d.3} parent=1 // loop_exit
      _
    %472 = vsyncpa [#allocation3], 1
    %s473 = scalar_lea.sflag [#allocation3], 1
    %474 = vsyncpa %s473, 1

// kernel: switch_norm1d.2
$region0: #{switch_norm1d.2}
  #allocation0 [shape = 'u32[]', space=smem, size = 0x4, offset = 0x4, fixed_abs, tag = 'smem constant byte address 0x4 - core index']
  #allocation1 [shape = 'u32[144,128]{1,0:T(1,128)}', space=vmem, size = 0x12000, scoped, tag = 'internal scratch']
  %s0 = inlined_call_operand.vmem [shape: f32[2,4,8], index: 0, kind: input, shape index: {}]
  %s1 = inlined_call_operand.vmem [shape: f32[2,4], index: 1, kind: output, shape index: {0}]
  %s2 = inlined_call_operand.vmem [shape: f32[2,4], index: 2, kind: output, shape index: {1}]
  %3 = xla_tuple %s1, %s2
  %s4 = sld [smem:[#allocation0]]
  $region26: #{switch_norm1d.2} parent=0
    _
  %s6 = ssub.s32 1, %s4
  %s7 = scalar_select 0, %s6, %s4
  // Predicated region
  $region2: #{switch_norm1d.2} parent=0 // pred_check
    _
  $region3: #{switch_norm1d.2} parent=0 // pred_check_branch
    %9 = sbr.rel (0) target = $region5
  $region4: #{switch_norm1d.2} parent=0 // pred_region
    _
  $region5: #{switch_norm1d.2} parent=0 // pred_fallthru
    _
  %p10 = scmp.eq.s32.totalorder 0, 0
  // Predicated region
  $region6: #{switch_norm1d.2} parent=0 // pred_check
    %p11 = pneg %p10
  $region7: #{switch_norm1d.2} parent=0 // pred_check_branch
    %13 = sbr.rel (%p11) target = $region9
  $region8: #{switch_norm1d.2} parent=0 // pred_region
    %vm14 = vcmask 25600
    %15 = vst.msk [vmem:[%s1] sm:$0x3] %vm14, 0.0
    %16 = vst.msk [vmem:[%s2] sm:$0x3] %vm14, 0.0
  $region9: #{switch_norm1d.2} parent=0 // pred_fallthru
    _
  %v17 = vld [vmem:[%s0] sm:$0xf]
  %v18 = vld [vmem:[%s0 + $0x4] sm:$0xf]
  %v19 = vld [vmem:[%s1] sm:$0x3]
  %vm20 = vcmask 60416
  %v21 = vsel %vm20, %v17, 0.0
  %22 = vadd.xlane.f32.xlu0 %v21
  %v23 = vpop.xlane.xlu0 %22
  %v24 = vsel %vm20, %v18, 0.0
  %25 = vadd.xlane.f32.xlu0 %v24
  %v26 = vpop.xlane.xlu0 %25
  %v29 = vlaneseq
  %v30 = vand.u32 %v29, 127
  %v31 = vlaneseq
  %v32 = vshrl.u32 %v31, 7
  %v33 = vsub.s32 %v30, %v32
  %v34 = vrot.slane %v23, %v33
  %v35 = vlaneseq
  %v36 = vshrl.u32 %v35, 7
  %v37 = vsub.s32 %v30, %v36
  %v38 = vrot.slane %v26, %v37
  %vm39 = vcmask 1041409
  %v40 = vsel %vm39, %v38, %v34
  %v42 = vadd.f32 %v19, %v40
  %vm43 = vcmask 25600
  %44 = vst.msk [vmem:[%s1] sm:$0x3] %vm43, %v42
  %v45 = vld [vmem:[%s2] sm:$0x3]
  %v46 = vmul.f32 %v17, %v17
  %v47 = vmul.f32 %v18, %v18
  %v48 = vsel %vm20, %v46, 0.0
  %49 = vadd.xlane.f32.xlu0 %v48
  %v50 = vpop.xlane.xlu0 %49
  %v51 = vsel %vm20, %v47, 0.0
  %52 = vadd.xlane.f32.xlu0 %v51
  %v53 = vpop.xlane.xlu0 %52
  %v56 = vlaneseq
  %v57 = vshrl.u32 %v56, 7
  %v58 = vsub.s32 %v30, %v57
  %v59 = vrot.slane %v50, %v58
  %v60 = vlaneseq
  %v61 = vshrl.u32 %v60, 7
  %v62 = vsub.s32 %v30, %v61
  %v63 = vrot.slane %v53, %v62
  %v64 = vsel %vm39, %v63, %v59
  %v66 = vadd.f32 %v45, %v64
  %67 = vst.msk [vmem:[%s2] sm:$0x3] %vm43, %v66
  // Predicated region
  $region10: #{switch_norm1d.2} parent=0 // pred_check
    _
  $region11: #{switch_norm1d.2} parent=0 // pred_check_branch
    %69 = sbr.rel (0) target = $region13
  $region12: #{switch_norm1d.2} parent=0 // pred_region
    _
  $region13: #{switch_norm1d.2} parent=0 // pred_fallthru
    _
  // Predicated region
  $region14: #{switch_norm1d.2} parent=0 // pred_check
    _
  $region15: #{switch_norm1d.2} parent=0 // pred_check_branch
    %71 = sbr.rel (0) target = $region17
  $region16: #{switch_norm1d.2} parent=0 // pred_region
    _
  $region17: #{switch_norm1d.2} parent=0 // pred_fallthru
    _
  // Predicated region
  $region18: #{switch_norm1d.2} parent=0 // pred_check
    _
  $region19: #{switch_norm1d.2} parent=0 // pred_check_branch
    %73 = sbr.rel (0) target = $region21
  $region20: #{switch_norm1d.2} parent=0 // pred_region
    _
  $region21: #{switch_norm1d.2} parent=0 // pred_fallthru
    _
  // Predicated region
  $region22: #{switch_norm1d.2} parent=0 // pred_check
    _
  $region23: #{switch_norm1d.2} parent=0 // pred_check_branch
    %75 = sbr.rel (0) target = $region25
  $region24: #{switch_norm1d.2} parent=0 // pred_region
    _
  $region25: #{switch_norm1d.2} parent=0 // pred_fallthru
    _

</llo_original>
